<compile_context>
chip_gen: v7x
topology: tpu7x:2x2x1
jax: 0.10.0
libtpu: 0.0.40
codegen_flags: <defaults>
</compile_context>

<pallas_src>
import functools

import jax
import jax.numpy as jnp
from jax import lax
from jax.experimental import pallas as pl
from jax.experimental.pallas import tpu as pltpu


def _round_up(x, m):
    return (x + m - 1) // m * m


def _temporal_attention_kernel(x_ref, tp_ref,
                               wqkv_ref, bqkv_ref,
                               wt_ref, bt_ref,
                               out_ref, attn_ref,
                               *, d_k, mxu_dtype):
    f32 = jnp.float32

    x = x_ref[...]                        # (Bb, S, D_in)
    tp = tp_ref[...]                      # (Bb, T, D_t)
    bb, s_len, d_in = x.shape
    _, t_len, d_t = tp.shape
    dkp = out_ref.shape[-1]               # lane-padded head dim (multiple of 128)
    s_pad = attn_ref.shape[-1]            # lane-padded key dim (multiple of 128)

    def to_mxu(a):
        return a.astype(mxu_dtype)

    # ---- fused, lane-aligned Q/K/V projection: one lane-dense MXU matmul ----
    x2 = x.reshape(bb * s_len, d_in)
    qkv = jnp.dot(x2, wqkv_ref[...], preferred_element_type=f32) + bqkv_ref[...]
    # lane offsets 0 / dkp / 2*dkp are 128-aligned -> free vreg slices.
    q = qkv[:, 0 * dkp:1 * dkp].reshape(bb, s_len, dkp)
    k = qkv[:, 1 * dkp:2 * dkp].reshape(bb, s_len, dkp)
    v = qkv[:, 2 * dkp:3 * dkp].reshape(bb, s_len, dkp)

    # ---- time embedding projection ------------------------------------------
    tp2 = tp.reshape(bb * t_len, d_t)
    temb = (jnp.dot(tp2, wt_ref[...], preferred_element_type=f32)
            + bt_ref[...]).reshape(bb, t_len, dkp)             # (Bb, T, dkp)

    # ---- T = time_emb.repeat(1, S, 1):
    #      T^T @ T == S * (temb^T @ temb),  ||T||_F == sqrt(S) * ||temb||_F
    # Norm reduction hoisted before the gram matmul (XLU overlaps MXU).
    t_sq = jnp.sum(temb * temb, axis=(1, 2), keepdims=True)    # (Bb, 1, 1)
    t_norm = jnp.sqrt(f32(s_len) * t_sq)

    # transposed contraction (contract T axis of both operands, batch on Bb)
    gram = lax.dot_general(temb, temb,
                           dimension_numbers=(((1,), (1,)), ((0,), (0,))),
                           preferred_element_type=f32)         # (Bb, dkp, dkp)

    # fold the S*gram/(norm+eps) scaling and the 1/sqrt(d_k) score scale into
    # the small (dkp, dkp) matrix (one pass over dkp^2 instead of S^2).
    scale = f32(s_len) / ((t_norm + f32(1e-8)) * jnp.sqrt(f32(d_k)))
    t_scaled = gram * scale                                    # (Bb, dkp, dkp)

    # ---- scores = (Q @ T_scaled) @ K^T, bf16 MXU operands, f32 accumulation -
    qt = lax.dot_general(to_mxu(q), to_mxu(t_scaled),
                         dimension_numbers=(((2,), (1,)), ((0,), (0,))),
                         preferred_element_type=f32)           # (Bb, S, dkp)

    # Zero-pad K/V along the key axis so scores/attn are lane-dense (s_pad).
    if s_pad != s_len:
        zpad = jnp.zeros((bb, s_pad - s_len, dkp), f32)
        k = jnp.concatenate([k, zpad], axis=1)                 # (Bb, s_pad, dkp)
        v = jnp.concatenate([v, zpad], axis=1)                 # (Bb, s_pad, dkp)

    scores = lax.dot_general(to_mxu(qt), to_mxu(k),
                             dimension_numbers=(((2,), (2,)), ((0,), (0,))),
                             preferred_element_type=f32)       # (Bb, S, s_pad)

    if s_pad != s_len:
        col = lax.broadcasted_iota(jnp.int32, (1, 1, s_pad), 2)
        scores = jnp.where(col < s_len, scores, f32(-1e30))    # mask pad keys

    # ---- softmax over last dim (f32, stable); divide -> EUP approx reciprocal
    m = jnp.max(scores, axis=-1, keepdims=True)
    e = jnp.exp(scores - m)
    denom = jnp.sum(e, axis=-1, keepdims=True)
    attn = e * pl.reciprocal(denom, approx=True)               # (Bb, S, s_pad)

    out = lax.dot_general(to_mxu(attn), to_mxu(v),
                          dimension_numbers=(((2,), (1,)), ((0,), (0,))),
                          preferred_element_type=f32)          # (Bb, S, dkp)

    # Lane-dense stores (dkp and s_pad are multiples of 128).
    attn_ref[...] = attn.astype(attn_ref.dtype)
    out_ref[...] = out.astype(out_ref.dtype)


def temporal_attention(x, time_points, params, *, d_k, batch_block=None,
                       mxu_dtype=jnp.bfloat16):
    """x: (B, S, D_in), time_points: (B, T, D_t). Returns (output, attn_weights)."""
    B, S, D_in = x.shape
    _, T, D_t = time_points.shape

    dkp = _round_up(d_k, 128)       # lane-padded head dim
    s_pad = _round_up(S, 128)       # lane-padded key/attn dim

    # ---- lane-pad each projection, then fuse (q/k/v slices stay 128-aligned)
    def pad_cols(a):
        return jnp.pad(a, ((0, 0), (0, dkp - a.shape[1]))) if a.shape[1] != dkp else a

    wqkv = jnp.concatenate([pad_cols(params["wq"]), pad_cols(params["wk"]),
                            pad_cols(params["wv"])], axis=1)        # (D_in, 3*dkp)
    bqkv = jnp.concatenate([pad_cols(params["bq"]), pad_cols(params["bk"]),
                            pad_cols(params["bv"])], axis=1)        # (1, 3*dkp)
    wt = pad_cols(params["wt"])                                     # (D_t, dkp)
    bt = pad_cols(params["bt"])                                     # (1, dkp)

    # ---- chip-aware VMEM budget (v7x: only 64 MiB per TensorCore) -----------
    try:
        vmem_cap = int(getattr(pltpu.get_tpu_info(), "vmem_capacity_bytes",
                               64 << 20))
    except Exception:
        vmem_cap = 64 << 20   # conservative (v7x per-TensorCore)
    usable_vmem = max(vmem_cap - (12 << 20), 16 << 20)

    def step_bytes(bb):
        f = 4
        # double-buffered pipelined input / output tiles
        dbl = 2 * f * bb * (S * D_in + T * D_t + S * dkp + S * s_pad)
        # (constant) weight buffers, also double-buffered by BlockSpec
        wts = 2 * f * (D_in * 3 * dkp + 3 * dkp + D_t * dkp + dkp)
        # in-kernel f32 intermediates: qkv, q/k/v/qt, temb, gram+t_scaled,
        # padded k/v, scores/e/attn, out
        inter = f * bb * (3 * S * dkp + 4 * S * dkp + T * dkp
                          + 2 * dkp * dkp + 2 * s_pad * dkp
                          + 3 * S * s_pad + S * dkp)
        # bf16 copies of MXU operands
        inter += (f // 2) * bb * (2 * S * dkp + 2 * s_pad * dkp + S * s_pad)
        return dbl + wts + inter

    # ---- batch_block: fit VMEM, keep grid >= 2 (v7x megacore), fill MXU rows
    if batch_block is None:
        budget = int(0.9 * usable_vmem)
        divisors = [d for d in range(1, B + 1) if B % d == 0]
        feasible = [d for d in divisors if step_bytes(d) <= budget] or [1]
        min_steps = 2 if B >= 2 else 1
        cands = [d for d in feasible if B // d >= min_steps] or feasible
        good = [d for d in cands if d * S >= 256]   # MXU / sublane row fill
        batch_block = min(good) if good else max(cands)
    assert B % batch_block == 0
    grid = (B // batch_block,)

    vmem_limit = int(min(usable_vmem,
                         max(32 << 20,
                             int(1.3 * step_bytes(batch_block)) + (4 << 20))))

    kernel = functools.partial(_temporal_attention_kernel,
                               d_k=d_k, mxu_dtype=mxu_dtype)

    const2d = lambda a: pl.BlockSpec(a.shape, lambda b: (0, 0))

    out_shape = (
        jax.ShapeDtypeStruct((B, S, dkp), jnp.float32),    # output (lane-dense)
        jax.ShapeDtypeStruct((B, S, s_pad), jnp.float32),  # attn   (lane-dense)
    )

    # Advisory cost estimate for the outer XLA scheduler.
    flops = 2 * B * (S * D_in * 3 * dkp + T * D_t * dkp + T * dkp * dkp
                     + S * dkp * dkp + 2 * S * s_pad * dkp)
    transcendentals = B * S * (s_pad + 1)
    bytes_accessed = 4 * (x.size + time_points.size + wqkv.size + bqkv.size
                          + wt.size + bt.size + B * S * dkp + B * S * s_pad)
    cost = pl.CostEstimate(flops=int(flops),
                           transcendentals=int(transcendentals),
                           bytes_accessed=int(bytes_accessed))

    out_full, attn_full = pl.pallas_call(
        kernel,
        out_shape=out_shape,
        grid=grid,
        in_specs=[
            pl.BlockSpec((batch_block, S, D_in), lambda b: (b, 0, 0)),   # x
            pl.BlockSpec((batch_block, T, D_t), lambda b: (b, 0, 0)),    # time_points
            const2d(wqkv), const2d(bqkv),
            const2d(wt), const2d(bt),
        ],
        out_specs=[
            pl.BlockSpec((batch_block, S, dkp), lambda b: (b, 0, 0)),
            pl.BlockSpec((batch_block, S, s_pad), lambda b: (b, 0, 0)),
        ],
        compiler_params=pltpu.CompilerParams(
            dimension_semantics=("parallel",),
            vmem_limit_bytes=vmem_limit),
        cost_estimate=cost,
    )(x, time_points, wqkv, bqkv, wt, bt)

    # Cheap XLA slices to drop the lane padding.
    out = out_full[:, :, :d_k] if dkp != d_k else out_full
    attn = attn_full[:, :, :S] if s_pad != S else attn_full
    return out, attn


def _reference(x, time_points, params, *, d_k):
    """Pure-JAX reference reproducing the PyTorch forward exactly."""
    B, S, _ = x.shape
    q = x @ params["wq"] + params["bq"]
    k = x @ params["wk"] + params["bk"]
    v = x @ params["wv"] + params["bv"]
    temb = time_points @ params["wt"] + params["bt"]          # (B, T, d_k)
    t_rep = jnp.tile(temb, (1, S, 1))                         # (B, T*S, d_k)
    t_norm = jnp.sqrt(jnp.sum(t_rep * t_rep, axis=(1, 2), keepdims=True))
    t_scaled = jnp.einsum("bnd,bne->bde", t_rep, t_rep) / (t_norm + 1e-8)
    scores = jnp.einsum("bsd,bde->bse", q, t_scaled)
    scores = jnp.einsum("bse,bte->bst", scores, k) / jnp.sqrt(jnp.float32(d_k))
    attn = jax.nn.softmax(scores, axis=-1)
    out = jnp.einsum("bst,btd->bsd", attn, v)
    return out, attn


if __name__ == "__main__":
    # Small synthetic config (module __init__: input_dim, d_k, time_emb_dim)
    B, S, INPUT_DIM = 2, 16, 32
    NUM_TIME_POINTS, TIME_EMB_DIM = 8, 16
    D_K = 32

    key = jax.random.PRNGKey(0)
    keys = jax.random.split(key, 10)

    x = jax.random.normal(keys[0], (B, S, INPUT_DIM), dtype=jnp.float32)
    time_points = jax.random.normal(keys[1], (B, NUM_TIME_POINTS, TIME_EMB_DIM),
                                    dtype=jnp.float32)

    def init_linear(kw, kb, fan_in, fan_out):
        bound = 1.0 / jnp.sqrt(jnp.float32(fan_in))
        w = jax.random.uniform(kw, (fan_in, fan_out), jnp.float32, -bound, bound)
        b = jax.random.uniform(kb, (1, fan_out), jnp.float32, -bound, bound)
        return w, b

    wq, bq = init_linear(keys[2], keys[3], INPUT_DIM, D_K)
    wk, bk = init_linear(keys[4], keys[5], INPUT_DIM, D_K)
    wv, bv = init_linear(keys[6], keys[7], INPUT_DIM, D_K)
    wt, bt = init_linear(keys[8], keys[9], TIME_EMB_DIM, D_K)

    params = dict(wq=wq, bq=bq, wk=wk, bk=bk, wv=wv, bv=bv, wt=wt, bt=bt)

    out, attn = temporal_attention(x, time_points, params, d_k=D_K)
    out = jax.block_until_ready(out)
    attn = jax.block_until_ready(attn)

    ref_out, ref_attn = _reference(x, time_points, params, d_k=D_K)
    assert out.shape == (B, S, D_K) and attn.shape == (B, S, S)
    # Tolerances account for bf16 MXU operands (f32 accumulation) and the
    # approximate (EUP) reciprocal in the softmax normalization.
    assert jnp.allclose(attn, ref_attn, atol=1e-2, rtol=1e-2)
    assert jnp.allclose(out, ref_out, atol=2e-2, rtol=1e-2)

    print("KERNEL_OK")
</pallas_src>

<mosaic_0001>
module attributes {stable_mosaic.version = 11 : i64} {
  func.func @_temporal_attention_kernel(%arg0: i32, %arg1: memref<1x16x32xf32, #tpu.memory_space<vmem>>, %arg2: memref<1x8x16xf32, #tpu.memory_space<vmem>>, %arg3: memref<32x384xf32, #tpu.memory_space<vmem>>, %arg4: memref<1x384xf32, #tpu.memory_space<vmem>>, %arg5: memref<16x128xf32, #tpu.memory_space<vmem>>, %arg6: memref<1x128xf32, #tpu.memory_space<vmem>>, %arg7: memref<1x16x128xf32, #tpu.memory_space<vmem>>, %arg8: memref<1x16x128xf32, #tpu.memory_space<vmem>>) attributes {dimension_semantics = [#tpu.dimension_semantics<parallel>], iteration_bounds = array<i64: 2>, scalar_prefetch = 0 : i64, scratch_operands = 0 : i64, tpu.core_type = #tpu.core_type<tc>, window_params = [{transform_indices = @transform_0, window_bounds = array<i64: 1, 16, 32>}, {transform_indices = @transform_1, window_bounds = array<i64: 1, 8, 16>}, {pipeline_mode = #tpu.pipeline_mode<synchronous>, transform_indices = @transform_2, window_bounds = array<i64: 32, 384>}, {pipeline_mode = #tpu.pipeline_mode<synchronous>, transform_indices = @transform_3, window_bounds = array<i64: 1, 384>}, {pipeline_mode = #tpu.pipeline_mode<synchronous>, transform_indices = @transform_4, window_bounds = array<i64: 16, 128>}, {pipeline_mode = #tpu.pipeline_mode<synchronous>, transform_indices = @transform_5, window_bounds = array<i64: 1, 128>}, {transform_indices = @transform_6, window_bounds = array<i64: 1, 16, 128>}, {transform_indices = @transform_7, window_bounds = array<i64: 1, 16, 128>}]} {
    %c0 = arith.constant 0 : index
    %c0_0 = arith.constant 0 : index
    %c0_1 = arith.constant 0 : index
    %0 = vector.load %arg1[%c0, %c0_0, %c0_1] : memref<1x16x32xf32, #tpu.memory_space<vmem>>, vector<1x16x32xf32>
    %c0_2 = arith.constant 0 : index
    %c0_3 = arith.constant 0 : index
    %c0_4 = arith.constant 0 : index
    %1 = vector.load %arg2[%c0_2, %c0_3, %c0_4] : memref<1x8x16xf32, #tpu.memory_space<vmem>>, vector<1x8x16xf32>
    %2 = vector.shape_cast %0 : vector<1x16x32xf32> to vector<16x32xf32>
    %c0_5 = arith.constant 0 : index
    %c0_6 = arith.constant 0 : index
    %3 = vector.load %arg3[%c0_5, %c0_6] : memref<32x384xf32, #tpu.memory_space<vmem>>, vector<32x384xf32>
    %cst = arith.constant dense<0.000000e+00> : vector<16x384xf32>
    %4 = tpu.matmul %2, %3, %cst {dimension_numbers = #tpu.dot_dimension_numbers<[1], [0], [0], [1], [0, 0, 1, 1], [], []>} : vector<16x32xf32>, vector<32x384xf32>, vector<16x384xf32> -> vector<16x384xf32>
    %c0_7 = arith.constant 0 : index
    %c0_8 = arith.constant 0 : index
    %5 = vector.load %arg4[%c0_7, %c0_8] : memref<1x384xf32, #tpu.memory_space<vmem>>, vector<1x384xf32>
    %6 = vector.broadcast %5 : vector<1x384xf32> to vector<16x384xf32>
    %7 = arith.addf %4, %6 : vector<16x384xf32>
    %8 = vector.extract_strided_slice %7 {offsets = [0, 0], sizes = [16, 128], strides = [1, 1]} : vector<16x384xf32> to vector<16x128xf32>
    %9 = vector.shape_cast %8 : vector<16x128xf32> to vector<1x16x128xf32>
    %10 = vector.extract_strided_slice %7 {offsets = [0, 128], sizes = [16, 128], strides = [1, 1]} : vector<16x384xf32> to vector<16x128xf32>
    %11 = vector.shape_cast %10 : vector<16x128xf32> to vector<1x16x128xf32>
    %12 = vector.extract_strided_slice %7 {offsets = [0, 256], sizes = [16, 128], strides = [1, 1]} : vector<16x384xf32> to vector<16x128xf32>
    %13 = vector.shape_cast %12 : vector<16x128xf32> to vector<1x16x128xf32>
    %14 = vector.shape_cast %1 : vector<1x8x16xf32> to vector<8x16xf32>
    %c0_9 = arith.constant 0 : index
    %c0_10 = arith.constant 0 : index
    %15 = vector.load %arg5[%c0_9, %c0_10] : memref<16x128xf32, #tpu.memory_space<vmem>>, vector<16x128xf32>
    %cst_11 = arith.constant dense<0.000000e+00> : vector<8x128xf32>
    %16 = tpu.matmul %14, %15, %cst_11 {dimension_numbers = #tpu.dot_dimension_numbers<[1], [0], [0], [1], [0, 0, 1, 1], [], []>} : vector<8x16xf32>, vector<16x128xf32>, vector<8x128xf32> -> vector<8x128xf32>
    %c0_12 = arith.constant 0 : index
    %c0_13 = arith.constant 0 : index
    %17 = vector.load %arg6[%c0_12, %c0_13] : memref<1x128xf32, #tpu.memory_space<vmem>>, vector<1x128xf32>
    %18 = vector.broadcast %17 : vector<1x128xf32> to vector<8x128xf32>
    %19 = arith.addf %16, %18 : vector<8x128xf32>
    %20 = vector.shape_cast %19 : vector<8x128xf32> to vector<1x8x128xf32>
    %21 = arith.mulf %20, %20 : vector<1x8x128xf32>
    %cst_14 = arith.constant dense<0.000000e+00> : vector<1xf32>
    %22 = vector.multi_reduction <add>, %21, %cst_14 [1, 2] : vector<1x8x128xf32> to vector<1xf32>
    %23 = vector.shape_cast %22 : vector<1xf32> to vector<1x1x1xf32>
    %cst_15 = arith.constant 1.600000e+01 : f32
    %24 = vector.broadcast %cst_15 : f32 to vector<1x1x1xf32>
    %25 = arith.mulf %24, %23 : vector<1x1x1xf32>
    %26 = math.sqrt %25 : vector<1x1x1xf32>
    %cst_16 = arith.constant dense<0.000000e+00> : vector<1x128x128xf32>
    %27 = tpu.matmul %20, %20, %cst_16 {dimension_numbers = #tpu.dot_dimension_numbers<[1], [1], [2], [2], [0, 0, 0, 2, 1, 2], [0], [0]>} : vector<1x8x128xf32>, vector<1x8x128xf32>, vector<1x128x128xf32> -> vector<1x128x128xf32>
    %cst_17 = arith.constant 9.99999993E-9 : f32
    %28 = vector.broadcast %cst_17 : f32 to vector<1x1x1xf32>
    %29 = arith.addf %26, %28 : vector<1x1x1xf32>
    %cst_18 = arith.constant 3.200000e+01 : f32
    %30 = math.sqrt %cst_18 : f32
    %31 = vector.broadcast %30 : f32 to vector<1x1x1xf32>
    %32 = arith.mulf %29, %31 : vector<1x1x1xf32>
    %cst_19 = arith.constant 1.600000e+01 : f32
    %33 = vector.broadcast %cst_19 : f32 to vector<1x1x1xf32>
    %34 = arith.divf %33, %32 : vector<1x1x1xf32>
    %35 = vector.broadcast %34 : vector<1x1x1xf32> to vector<1x128x128xf32>
    %36 = arith.mulf %27, %35 : vector<1x128x128xf32>
    %37 = arith.truncf %9 : vector<1x16x128xf32> to vector<1x16x128xbf16>
    %38 = arith.truncf %36 : vector<1x128x128xf32> to vector<1x128x128xbf16>
    %cst_20 = arith.constant dense<0.000000e+00> : vector<1x16x128xf32>
    %39 = tpu.matmul %37, %38, %cst_20 {dimension_numbers = #tpu.dot_dimension_numbers<[2], [1], [1], [2], [0, 0, 0, 1, 1, 2], [0], [0]>} : vector<1x16x128xbf16>, vector<1x128x128xbf16>, vector<1x16x128xf32> -> vector<1x16x128xf32>
    %cst_21 = arith.constant 0.000000e+00 : f32
    %40 = vector.broadcast %cst_21 : f32 to vector<1x112x128xf32>
    %41 = tpu.concatenate %11, %40 in 1 : vector<1x16x128xf32>, vector<1x112x128xf32> -> vector<1x128x128xf32>
    %42 = tpu.concatenate %13, %40 in 1 : vector<1x16x128xf32>, vector<1x112x128xf32> -> vector<1x128x128xf32>
    %43 = arith.truncf %39 : vector<1x16x128xf32> to vector<1x16x128xbf16>
    %44 = arith.truncf %41 : vector<1x128x128xf32> to vector<1x128x128xbf16>
    %cst_22 = arith.constant dense<0.000000e+00> : vector<1x16x128xf32>
    %45 = tpu.matmul %43, %44, %cst_22 {dimension_numbers = #tpu.dot_dimension_numbers<[2], [2], [1], [1], [0, 0, 0, 1, 1, 1], [0], [0]>} : vector<1x16x128xbf16>, vector<1x128x128xbf16>, vector<1x16x128xf32> -> vector<1x16x128xf32>
    %46 = tpu.iota {dimensions = array<i32: 2>} : vector<1x1x128xi32>
    %c16_i32 = arith.constant 16 : i32
    %47 = vector.broadcast %c16_i32 : i32 to vector<1x1x128xi32>
    %48 = arith.cmpi slt, %46, %47 : vector<1x1x128xi32>
    %cst_23 = arith.constant -1.000000e+30 : f32
    %49 = vector.shape_cast %48 : vector<1x1x128xi1> to vector<1x1x128xi1>
    %50 = vector.broadcast %49 : vector<1x1x128xi1> to vector<1x16x128xi1>
    %51 = vector.broadcast %cst_23 : f32 to vector<1x16x128xf32>
    %52 = arith.select %50, %45, %51 : vector<1x16x128xi1>, vector<1x16x128xf32>
    %cst_24 = arith.constant dense<0xFF800000> : vector<1x16xf32>
    %53 = vector.multi_reduction <maximumf>, %52, %cst_24 [2] : vector<1x16x128xf32> to vector<1x16xf32>
    %54 = vector.shape_cast %53 : vector<1x16xf32> to vector<1x16x1xf32>
    %55 = vector.broadcast %54 : vector<1x16x1xf32> to vector<1x16x128xf32>
    %56 = arith.subf %52, %55 : vector<1x16x128xf32>
    %57 = math.exp %56 : vector<1x16x128xf32>
    %cst_25 = arith.constant dense<0.000000e+00> : vector<1x16xf32>
    %58 = vector.multi_reduction <add>, %57, %cst_25 [2] : vector<1x16x128xf32> to vector<1x16xf32>
    %59 = vector.shape_cast %58 : vector<1x16xf32> to vector<1x16x1xf32>
    %60 = tpu.reciprocal %59 {approx = true} : vector<1x16x1xf32> -> vector<1x16x1xf32>
    %61 = vector.broadcast %60 : vector<1x16x1xf32> to vector<1x16x128xf32>
    %62 = arith.mulf %57, %61 : vector<1x16x128xf32>
    %63 = arith.truncf %62 : vector<1x16x128xf32> to vector<1x16x128xbf16>
    %64 = arith.truncf %42 : vector<1x128x128xf32> to vector<1x128x128xbf16>
    %cst_26 = arith.constant dense<0.000000e+00> : vector<1x16x128xf32>
    %65 = tpu.matmul %63, %64, %cst_26 {dimension_numbers = #tpu.dot_dimension_numbers<[2], [1], [1], [2], [0, 0, 0, 1, 1, 2], [0], [0]>} : vector<1x16x128xbf16>, vector<1x128x128xbf16>, vector<1x16x128xf32> -> vector<1x16x128xf32>
    %c0_27 = arith.constant 0 : index
    %c0_28 = arith.constant 0 : index
    %c0_29 = arith.constant 0 : index
    %66 = vector.load %arg8[%c0_27, %c0_28, %c0_29] : memref<1x16x128xf32, #tpu.memory_space<vmem>>, vector<1x16x128xf32>
    tpu.vector_store %arg8[%c0_27, %c0_28, %c0_29], %62 {strides = array<i32>} : memref<1x16x128xf32, #tpu.memory_space<vmem>>, vector<1x16x128xf32>,
    %c0_30 = arith.constant 0 : index
    %c0_31 = arith.constant 0 : index
    %c0_32 = arith.constant 0 : index
    %67 = vector.load %arg7[%c0_30, %c0_31, %c0_32] : memref<1x16x128xf32, #tpu.memory_space<vmem>>, vector<1x16x128xf32>
    tpu.vector_store %arg7[%c0_30, %c0_31, %c0_32], %65 {strides = array<i32>} : memref<1x16x128xf32, #tpu.memory_space<vmem>>, vector<1x16x128xf32>,
    return
  }
  func.func @transform_0(%arg0: i32) -> (i32, i32, i32) {
    %c0_i32 = arith.constant 0 : i32
    %c0_i32_0 = arith.constant 0 : i32
    %c0_i32_1 = arith.constant 0 : i32
    return %arg0, %c0_i32, %c0_i32_0 : i32, i32, i32
  }
  func.func @transform_1(%arg0: i32) -> (i32, i32, i32) {
    %c0_i32 = arith.constant 0 : i32
    %c0_i32_0 = arith.constant 0 : i32
    %c0_i32_1 = arith.constant 0 : i32
    return %arg0, %c0_i32, %c0_i32_0 : i32, i32, i32
  }
  func.func @transform_2(%arg0: i32) -> (i32, i32) {
    %c0_i32 = arith.constant 0 : i32
    %c0_i32_0 = arith.constant 0 : i32
    %c0_i32_1 = arith.constant 0 : i32
    return %c0_i32, %c0_i32_0 : i32, i32
  }
  func.func @transform_3(%arg0: i32) -> (i32, i32) {
    %c0_i32 = arith.constant 0 : i32
    %c0_i32_0 = arith.constant 0 : i32
    %c0_i32_1 = arith.constant 0 : i32
    return %c0_i32, %c0_i32_0 : i32, i32
  }
  func.func @transform_4(%arg0: i32) -> (i32, i32) {
    %c0_i32 = arith.constant 0 : i32
    %c0_i32_0 = arith.constant 0 : i32
    %c0_i32_1 = arith.constant 0 : i32
    return %c0_i32, %c0_i32_0 : i32, i32
  }
  func.func @transform_5(%arg0: i32) -> (i32, i32) {
    %c0_i32 = arith.constant 0 : i32
    %c0_i32_0 = arith.constant 0 : i32
    %c0_i32_1 = arith.constant 0 : i32
    return %c0_i32, %c0_i32_0 : i32, i32
  }
  func.func @transform_6(%arg0: i32) -> (i32, i32, i32) {
    %c0_i32 = arith.constant 0 : i32
    %c0_i32_0 = arith.constant 0 : i32
    %c0_i32_1 = arith.constant 0 : i32
    return %arg0, %c0_i32, %c0_i32_0 : i32, i32, i32
  }
  func.func @transform_7(%arg0: i32) -> (i32, i32, i32) {
    %c0_i32 = arith.constant 0 : i32
    %c0_i32_0 = arith.constant 0 : i32
    %c0_i32_1 = arith.constant 0 : i32
    return %arg0, %c0_i32, %c0_i32_0 : i32, i32, i32
  }
}

</mosaic_0001>

<llo_original>
// kernel: tpu_custom_call.1
$region0: #{tpu_custom_call.1}
  #allocation0 [shape = 'u32[]', space=smem, size = 0x4, offset = 0x4, fixed_abs, tag = 'smem constant byte address 0x4 - core index']
  #allocation1 [shape = 'u32[144,128]{1,0:T(1,128)}', space=vmem, size = 0x12000, scoped, tag = 'internal scratch']
  %s0 = inlined_call_operand.hbm [shape: f32[2,16,32], index: 0, kind: input, shape index: {}]
  %s1 = inlined_call_operand.hbm [shape: f32[2,8,16], index: 1, kind: input, shape index: {}]
  %s2 = inlined_call_operand.hbm [shape: f32[32,384], index: 2, kind: input, shape index: {}]
  %s3 = inlined_call_operand.vmem [shape: f32[1,384], index: 3, kind: input, shape index: {}]
  %s4 = inlined_call_operand.hbm [shape: f32[16,128], index: 4, kind: input, shape index: {}]
  %s5 = inlined_call_operand.vmem [shape: f32[1,128], index: 5, kind: input, shape index: {}]
  %s6 = inlined_call_operand.hbm [shape: f32[2,16,128], index: 6, kind: output, shape index: {0}]
  %s7 = inlined_call_operand.hbm [shape: f32[2,16,128], index: 7, kind: output, shape index: {1}]
  %8 = xla_tuple %s6, %s7
  %s9 = sld [smem:[#allocation0]]
  $region81: #{tpu_custom_call.1} parent=0
    _
  %s11 = ssub.s32 1, %s9
  %s12 = scalar_select 0, %s11, %s9
  $region1: #{tpu_custom_call.1} parent=0
    #allocation2 [shape = 'u8[16384]{0}', space=vmem, size = 0x4000, scoped, tag = 'input window, operand 0']
    #allocation3 [shape = 's32[2]{0}', space=sflag, size = 0x8, scoped, tag = 'scoped memory for tpu_custom_call.1']
    #allocation4 [shape = 's32[2]{0}', space=sflag, size = 0x8, scoped, tag = 'scoped memory for tpu_custom_call.1']
    #allocation5 [shape = 'u8[8192]{0}', space=vmem, size = 0x2000, scoped, tag = 'input window, operand 1']
    #allocation6 [shape = 's32[2]{0}', space=sflag, size = 0x8, scoped, tag = 'scoped memory for tpu_custom_call.1']
    #allocation7 [shape = 'u8[49152]{0}', space=vmem, size = 0xc000, scoped, tag = 'input window, operand 2, single buffered']
    #allocation8 [shape = 'u8[8192]{0}', space=vmem, size = 0x2000, scoped, tag = 'input window, operand 4, single buffered']
    #allocation9 [shape = 's32[1]{0}', space=sflag, size = 0x4, scoped, tag = 'scoped memory for tpu_custom_call.1']
    #allocation10 [shape = 'u8[16384]{0}', space=vmem, size = 0x4000, scoped, tag = 'output window, operand 0']
    #allocation11 [shape = 'u8[16384]{0}', space=vmem, size = 0x4000, scoped, tag = 'output window, operand 1']
    #allocation12 [shape = 's32[2]{0}', space=sflag, size = 0x8, scoped, tag = 'scoped memory for tpu_custom_call.1']
    %13 = vsyncpa [#allocation3], 0
    %s14 = scalar_lea.sflag [#allocation3], 1
    %15 = vsyncpa %s14, 0
    %16 = vsyncpa [#allocation6], 0
    %s17 = scalar_lea.sflag [#allocation6], 1
    %18 = vsyncpa %s17, 0
    %19 = vsyncpa [#allocation9], 0
    %20 = vsyncpa [#allocation4], 0
    %s21 = scalar_lea.sflag [#allocation4], 1
    %22 = vsyncpa %s21, 0
    %23 = vsyncpa [#allocation12], 0
    %s24 = scalar_lea.sflag [#allocation12], 1
    %25 = vsyncpa %s24, 0
    loop: start=0, step=1, limit=4
    $region2: #{tpu_custom_call.1} parent=1 // loop_pre_header
      _
    $region3: #{tpu_custom_call.1} parent=1 // loop_header
      %s27 = sphi 0, %s31
      %p28 = scmp.ge.s32.totalorder %s27, 4
      %s37 = sphi 0, %s39
      %s40 = sphi 0, %s37
      %s41 = sphi 0, %s40
      %s57 = sphi 0, %s41
      %s63 = sphi 0, %s65
      %s66 = sphi 0, %s63
      %s67 = sphi 0, %s66
      %s83 = sphi 0, %s67
      %s87 = sphi 0, %s87
      %s89 = sphi 0, %s87
      %s90 = sphi 0, %s89
      %s104 = sphi 0, %s90
      %s108 = sphi 0, %s108
      %s110 = sphi 0, %s108
      %s111 = sphi 0, %s110
      %s125 = sphi 0, %s111
      %s129 = sphi 0, %s129
      %s131 = sphi 0, %s129
      %s132 = sphi 0, %s131
      %s146 = sphi 0, %s132
      %s150 = sphi 0, %s150
      %s152 = sphi 0, %s150
      %s153 = sphi 0, %s152
      %s167 = sphi 0, %s153
      %s173 = sphi 0, %s175
      %s176 = sphi 0, %s173
      %s177 = sphi 0, %s176
      %s193 = sphi 0, %s177
      %s199 = sphi 0, %s201
      %s202 = sphi 0, %s199
      %s203 = sphi 0, %s202
      %s219 = sphi 0, %s203
    $region4: #{tpu_custom_call.1} parent=1 // loop_header_branch
      %30 = sbr.rel (%p28) target = $region8
    $region5: #{tpu_custom_call.1} parent=1 // loop_body
      %s32 = ssub.s32 %s27, 1
      %s33 = ssub.s32 %s27, 2
      %s34 = sadd.s32 %s27, 1
      %s35 = ssub.s32 %s27, %s34
      %p36 = scmp.eq.s32.totalorder %s35, 0
      %s38 = sadd.s32 %s37, 1
      %s39 = scalar_select %p36, %s37, %s38
      %p42 = pneg %p36
      %p43 = scmp.eq.s32.totalorder %s27, 1
      %p44 = por %p42, %p43
      %p45 = scmp.ne.s32.totalorder %s37, %s40
      %p46 = scmp.eq.s32.totalorder %s27, 0
      %p47 = por %p45, %p46
      %p48 = scmp.ne.s32.totalorder %s37, %s40
      %p49 = scmp.eq.s32.totalorder %s32, 1
      %p50 = por %p48, %p49
      %p51 = scmp.ne.s32.totalorder %s40, %s41
      %p52 = scmp.eq.s32.totalorder %s32, 0
      %p53 = por %p51, %p52
      %p54 = scmp.ne.s32.totalorder %s40, %s41
      %p55 = scmp.eq.s32.totalorder %s33, 1
      %p56 = por %p54, %p55
      %p58 = scmp.ne.s32.totalorder %s41, %s57
      %p59 = scmp.eq.s32.totalorder %s33, 0
      %p60 = por %p58, %p59
      %s61 = ssub.s32 %s27, %s34
      %p62 = scmp.eq.s32.totalorder %s61, 0
      %s64 = sadd.s32 %s63, 1
      %s65 = scalar_select %p62, %s63, %s64
      %p68 = pneg %p62
      %p69 = scmp.eq.s32.totalorder %s27, 1
      %p70 = por %p68, %p69
      %p71 = scmp.ne.s32.totalorder %s63, %s66
      %p72 = scmp.eq.s32.totalorder %s27, 0
      %p73 = por %p71, %p72
      %p74 = scmp.ne.s32.totalorder %s63, %s66
      %p75 = scmp.eq.s32.totalorder %s32, 1
      %p76 = por %p74, %p75
      %p77 = scmp.ne.s32.totalorder %s66, %s67
      %p78 = scmp.eq.s32.totalorder %s32, 0
      %p79 = por %p77, %p78
      %p80 = scmp.ne.s32.totalorder %s66, %s67
      %p81 = scmp.eq.s32.totalorder %s33, 1
      %p82 = por %p80, %p81
      %p84 = scmp.ne.s32.totalorder %s67, %s83
      %p85 = scmp.eq.s32.totalorder %s33, 0
      %p86 = por %p84, %p85
      %s88 = sadd.s32 %s87, 1
      %p91 = scmp.eq.s32.totalorder %s27, 1
      %p92 = scmp.ne.s32.totalorder %s87, %s89
      %p93 = scmp.eq.s32.totalorder %s27, 0
      %p94 = por %p92, %p93
      %p95 = scmp.ne.s32.totalorder %s87, %s89
      %p96 = scmp.eq.s32.totalorder %s32, 1
      %p97 = por %p95, %p96
      %p98 = scmp.ne.s32.totalorder %s89, %s90
      %p99 = scmp.eq.s32.totalorder %s32, 0
      %p100 = por %p98, %p99
      %p101 = scmp.ne.s32.totalorder %s89, %s90
      %p102 = scmp.eq.s32.totalorder %s33, 1
      %p103 = por %p101, %p102
      %p105 = scmp.ne.s32.totalorder %s90, %s104
      %p106 = scmp.eq.s32.totalorder %s33, 0
      %p107 = por %p105, %p106
      %s109 = sadd.s32 %s108, 1
      %p112 = scmp.eq.s32.totalorder %s27, 1
      %p113 = scmp.ne.s32.totalorder %s108, %s110
      %p114 = scmp.eq.s32.totalorder %s27, 0
      %p115 = por %p113, %p114
      %p116 = scmp.ne.s32.totalorder %s108, %s110
      %p117 = scmp.eq.s32.totalorder %s32, 1
      %p118 = por %p116, %p117
      %p119 = scmp.ne.s32.totalorder %s110, %s111
      %p120 = scmp.eq.s32.totalorder %s32, 0
      %p121 = por %p119, %p120
      %p122 = scmp.ne.s32.totalorder %s110, %s111
      %p123 = scmp.eq.s32.totalorder %s33, 1
      %p124 = por %p122, %p123
      %p126 = scmp.ne.s32.totalorder %s111, %s125
      %p127 = scmp.eq.s32.totalorder %s33, 0
      %p128 = por %p126, %p127
      %s130 = sadd.s32 %s129, 1
      %p133 = scmp.eq.s32.totalorder %s27, 1
      %p134 = scmp.ne.s32.totalorder %s129, %s131
      %p135 = scmp.eq.s32.totalorder %s27, 0
      %p136 = por %p134, %p135
      %p137 = scmp.ne.s32.totalorder %s129, %s131
      %p138 = scmp.eq.s32.totalorder %s32, 1
      %p139 = por %p137, %p138
      %p140 = scmp.ne.s32.totalorder %s131, %s132
      %p141 = scmp.eq.s32.totalorder %s32, 0
      %p142 = por %p140, %p141
      %p143 = scmp.ne.s32.totalorder %s131, %s132
      %p144 = scmp.eq.s32.totalorder %s33, 1
      %p145 = por %p143, %p144
      %p147 = scmp.ne.s32.totalorder %s132, %s146
      %p148 = scmp.eq.s32.totalorder %s33, 0
      %p149 = por %p147, %p148
      %s151 = sadd.s32 %s150, 1
      %p154 = scmp.eq.s32.totalorder %s27, 1
      %p155 = scmp.ne.s32.totalorder %s150, %s152
      %p156 = scmp.eq.s32.totalorder %s27, 0
      %p157 = por %p155, %p156
      %p158 = scmp.ne.s32.totalorder %s150, %s152
      %p159 = scmp.eq.s32.totalorder %s32, 1
      %p160 = por %p158, %p159
      %p161 = scmp.ne.s32.totalorder %s152, %s153
      %p162 = scmp.eq.s32.totalorder %s32, 0
      %p163 = por %p161, %p162
      %p164 = scmp.ne.s32.totalorder %s152, %s153
      %p165 = scmp.eq.s32.totalorder %s33, 1
      %p166 = por %p164, %p165
      %p168 = scmp.ne.s32.totalorder %s153, %s167
      %p169 = scmp.eq.s32.totalorder %s33, 0
      %p170 = por %p168, %p169
      %s171 = ssub.s32 %s27, %s34
      %p172 = scmp.eq.s32.totalorder %s171, 0
      %s174 = sadd.s32 %s173, 1
      %s175 = scalar_select %p172, %s173, %s174
      %p178 = pneg %p172
      %p179 = scmp.eq.s32.totalorder %s27, 1
      %p180 = por %p178, %p179
      %p181 = scmp.ne.s32.totalorder %s173, %s176
      %p182 = scmp.eq.s32.totalorder %s27, 0
      %p183 = por %p181, %p182
      %p184 = scmp.ne.s32.totalorder %s173, %s176
      %p185 = scmp.eq.s32.totalorder %s32, 1
      %p186 = por %p184, %p185
      %p187 = scmp.ne.s32.totalorder %s176, %s177
      %p188 = scmp.eq.s32.totalorder %s32, 0
      %p189 = por %p187, %p188
      %p190 = scmp.ne.s32.totalorder %s176, %s177
      %p191 = scmp.eq.s32.totalorder %s33, 1
      %p192 = por %p190, %p191
      %p194 = scmp.ne.s32.totalorder %s177, %s193
      %p195 = scmp.eq.s32.totalorder %s33, 0
      %p196 = por %p194, %p195
      %s197 = ssub.s32 %s27, %s34
      %p198 = scmp.eq.s32.totalorder %s197, 0
      %s200 = sadd.s32 %s199, 1
      %s201 = scalar_select %p198, %s199, %s200
      %p204 = pneg %p198
      %p205 = scmp.eq.s32.totalorder %s27, 1
      %p206 = por %p204, %p205
      %p207 = scmp.ne.s32.totalorder %s199, %s202
      %p208 = scmp.eq.s32.totalorder %s27, 0
      %p209 = por %p207, %p208
      %p210 = scmp.ne.s32.totalorder %s199, %s202
      %p211 = scmp.eq.s32.totalorder %s32, 1
      %p212 = por %p210, %p211
      %p213 = scmp.ne.s32.totalorder %s202, %s203
      %p214 = scmp.eq.s32.totalorder %s32, 0
      %p215 = por %p213, %p214
      %p216 = scmp.ne.s32.totalorder %s202, %s203
      %p217 = scmp.eq.s32.totalorder %s33, 1
      %p218 = por %p216, %p217
      %p220 = scmp.ne.s32.totalorder %s203, %s219
      %p221 = scmp.eq.s32.totalorder %s33, 0
      %p222 = por %p220, %p221
      %p223 = scmp.le.s32.totalorder 1, %s27
      %p224 = scmp.lt.s32.totalorder %s27, 3
      %p225 = pnand %p223, %p224
      %p226 = pneg %p225
      // Predicated region
      $region9: #{tpu_custom_call.1} parent=5 // pred_check
        _
      $region10: #{tpu_custom_call.1} parent=5 // pred_check_branch
        %228 = sbr.rel (%p225) target = $region12
      $region11: #{tpu_custom_call.1} parent=5 // pred_region
        %s229 = ssub.s32 %s27, 1
        // Predicated region
        $region13: #{tpu_custom_call.1} parent=11 // pred_check
          %p230 = pneg %p100
        $region14: #{tpu_custom_call.1} parent=11 // pred_check_branch
          %232 = sbr.rel (%p230) target = $region16
        $region15: #{tpu_custom_call.1} parent=11 // pred_region
          %s234 = ssub.s32 1536, 1536
          %235 = vsyncadd [#allocation6], %s234
          %s236 = sshll.u32 [#allocation7], 4
          %s237 = int_to_ptr.vmem [resolvable:$true] %s236
          %242 = dma.hbm_to_vmem [thread:$0]  %s2, 1536, %s237, [#allocation6], 384, 384, 24
        $region16: #{tpu_custom_call.1} parent=11 // pred_fallthru
          _
        // Predicated region
        $region17: #{tpu_custom_call.1} parent=11 // pred_check
          %p243 = pneg %p121
        $region18: #{tpu_custom_call.1} parent=11 // pred_check_branch
          %245 = sbr.rel (%p243) target = $region20
        $region19: #{tpu_custom_call.1} parent=11 // pred_region
          _
        $region20: #{tpu_custom_call.1} parent=11 // pred_fallthru
          _
        // Predicated region
        $region21: #{tpu_custom_call.1} parent=11 // pred_check
          %p246 = pneg %p142
        $region22: #{tpu_custom_call.1} parent=11 // pred_check_branch
          %248 = sbr.rel (%p246) target = $region24
        $region23: #{tpu_custom_call.1} parent=11 // pred_region
          %s250 = ssub.s32 256, 256
          %251 = vsyncadd [#allocation9], %s250
          %s252 = sshll.u32 [#allocation8], 4
          %s253 = int_to_ptr.vmem [resolvable:$true] %s252
          %258 = dma.hbm_to_vmem [thread:$0]  %s4, 256, %s253, [#allocation9], 128, 128, 8
        $region24: #{tpu_custom_call.1} parent=11 // pred_fallthru
          _
        // Predicated region
        $region25: #{tpu_custom_call.1} parent=11 // pred_check
          %p259 = pneg %p163
        $region26: #{tpu_custom_call.1} parent=11 // pred_check_branch
          %261 = sbr.rel (%p259) target = $region28
        $region27: #{tpu_custom_call.1} parent=11 // pred_region
          _
        $region28: #{tpu_custom_call.1} parent=11 // pred_fallthru
          _
      $region12: #{tpu_custom_call.1} parent=5 // pred_fallthru
        _
      %p262 = scmp.lt.s32.totalorder %s27, 2
      // Predicated region
      $region29: #{tpu_custom_call.1} parent=5 // pred_check
        %p263 = pneg %p262
      $region30: #{tpu_custom_call.1} parent=5 // pred_check_branch
        %265 = sbr.rel (%p263) target = $region32
      $region31: #{tpu_custom_call.1} parent=5 // pred_region
        // Predicated region
        $region33: #{tpu_custom_call.1} parent=31 // pred_check
          %p266 = pneg %p47
        $region34: #{tpu_custom_call.1} parent=31 // pred_check_branch
          %268 = sbr.rel (%p266) target = $region36
        $region35: #{tpu_custom_call.1} parent=31 // pred_region
          %s269 = sand.u32 %s37, 1
          %s270 = scalar_lea.sflag [#allocation3], %s269
          %s271 = sand.u32 %s37, 1
          %s272 = smul.addr %s271, 16
          %s273 = scalar_lea.vmem [#allocation2], %s272
          %s275 = ssub.s32 256, 256
          %276 = vsyncadd %s270, %s275
          %s277 = smul.addr %s27, 2
          %s278 = smul.addr %s277, 128
          %s279 = scalar_lea.hbm %s0, %s278
          %s280 = sshll.u32 %s273, 4
          %s281 = int_to_ptr.vmem [resolvable:$true] %s280
          %286 = dma.hbm_to_vmem [thread:$0]  %s279, 256, %s281, %s270, 128, 128, 8
        $region36: #{tpu_custom_call.1} parent=31 // pred_fallthru
          _
        // Predicated region
        $region37: #{tpu_custom_call.1} parent=31 // pred_check
          %p287 = pneg %p73
        $region38: #{tpu_custom_call.1} parent=31 // pred_check_branch
          %289 = sbr.rel (%p287) target = $region40
        $region39: #{tpu_custom_call.1} parent=31 // pred_region
          %s290 = sand.u32 %s27, 1
          %s291 = scalar_lea.sflag [#allocation6], %s290
          %s292 = sand.u32 %s63, 1
          %s293 = smul.addr %s292, 8
          %s294 = scalar_lea.vmem [#allocation5], %s293
          %s296 = ssub.s32 128, 128
          %297 = vsyncadd %s291, %s296
          %s298 = smul.addr %s27, 128
          %s299 = scalar_lea.hbm %s1, %s298
          %s301 = sshll.u32 %s294, 4
          %s302 = int_to_ptr.vmem [resolvable:$true] %s301
          %304 = dma.hbm_to_vmem [thread:$0]  %s299, 128, %s302, %s291
        $region40: #{tpu_custom_call.1} parent=31 // pred_fallthru
          _
      $region32: #{tpu_custom_call.1} parent=5 // pred_fallthru
        _
      %p305 = scmp.le.s32.totalorder 1, %s27
      %p306 = scmp.lt.s32.totalorder %s27, 3
      %p307 = pnand %p305, %p306
      %p308 = pneg %p307
      // Predicated region
      $region41: #{tpu_custom_call.1} parent=5 // pred_check
        _
      $region42: #{tpu_custom_call.1} parent=5 // pred_check_branch
        %310 = sbr.rel (%p307) target = $region44
      $region43: #{tpu_custom_call.1} parent=5 // pred_region
        %s311 = ssub.s32 %s27, 1
        %s312 = sand.u32 %s40, 1
        %s313 = scalar_lea.sflag [#allocation3], %s312
        %s314 = sand.u32 %s40, 1
        %s315 = smul.addr %s314, 16
        %s316 = scalar_lea.vmem [#allocation2], %s315
        // Predicated region
        $region45: #{tpu_custom_call.1} parent=43 // pred_check
          %p317 = pneg %p53
        $region46: #{tpu_custom_call.1} parent=43 // pred_check_branch
          %319 = sbr.rel (%p317) target = $region48
        $region47: #{tpu_custom_call.1} parent=43 // pred_region
          %320 = dma.done %s313, 256
        $region48: #{tpu_custom_call.1} parent=43 // pred_fallthru
          _
        %s321 = sand.u32 %s32, 1
        %s322 = scalar_lea.sflag [#allocation6], %s321
        %s323 = sand.u32 %s66, 1
        %s324 = smul.addr %s323, 8
        %s325 = scalar_lea.vmem [#allocation5], %s324
        // Predicated region
        $region49: #{tpu_custom_call.1} parent=43 // pred_check
          %p326 = pneg %p79
        $region50: #{tpu_custom_call.1} parent=43 // pred_check_branch
          %328 = sbr.rel (%p326) target = $region52
        $region51: #{tpu_custom_call.1} parent=43 // pred_region
          %329 = dma.done %s322, 128
        $region52: #{tpu_custom_call.1} parent=43 // pred_fallthru
          _
        // Predicated region
        $region53: #{tpu_custom_call.1} parent=43 // pred_check
          %p330 = pneg %p100
        $region54: #{tpu_custom_call.1} parent=43 // pred_check_branch
          %332 = sbr.rel (%p330) target = $region56
        $region55: #{tpu_custom_call.1} parent=43 // pred_region
          %333 = dma.done [#allocation6], 1536
        $region56: #{tpu_custom_call.1} parent=43 // pred_fallthru
          _
        // Predicated region
        $region57: #{tpu_custom_call.1} parent=43 // pred_check
          %p334 = pneg %p142
        $region58: #{tpu_custom_call.1} parent=43 // pred_check_branch
          %336 = sbr.rel (%p334) target = $region60
        $region59: #{tpu_custom_call.1} parent=43 // pred_region
          %337 = dma.done [#allocation9], 256
        $region60: #{tpu_custom_call.1} parent=43 // pred_fallthru
          _
        %s338 = sand.u32 %s40, 1
        %s339 = scalar_lea.sflag [#allocation3], %s338
        %s340 = sand.u32 %s40, 1
        %s341 = smul.addr %s340, 16
        %s342 = scalar_lea.vmem [#allocation2], %s341
        %p343 = pneg %p53
        %p344 = pneg %p50
        %s345 = sand.u32 %s32, 1
        %s346 = scalar_lea.sflag [#allocation6], %s345
        %s347 = sand.u32 %s66, 1
        %s348 = smul.addr %s347, 8
        %s349 = scalar_lea.vmem [#allocation5], %s348
        %p350 = pneg %p79
        %p351 = pneg %p76
        %p352 = pneg %p100
        %p353 = pneg %p97
        %p354 = pneg %p121
        %p355 = pneg %p118
        %p356 = pneg %p142
        %p357 = pneg %p139
        %p358 = pneg %p163
        %p359 = pneg %p160
        %p360 = pneg %p189
        %p361 = pneg %p186
        %s362 = sand.u32 %s176, 1
        %s363 = scalar_lea.sflag [#allocation4], %s362
        %s364 = sand.u32 %s176, 1
        %s365 = smul.addr %s364, 16
        %s366 = scalar_lea.vmem [#allocation10], %s365
        %p367 = pneg %p215
        %p368 = pneg %p212
        %s369 = sand.u32 %s202, 1
        %s370 = scalar_lea.sflag [#allocation12], %s369
        %s371 = sand.u32 %s202, 1
        %s372 = smul.addr %s371, 16
        %s373 = scalar_lea.vmem [#allocation11], %s372
        %v375 = vld [vmem:[%s316] sm:$0xff]
        %v376 = vld [vmem:[%s316 + $0x8] sm:$0xff]
        %v377 = vld [vmem:[%s325] sm:$0xff]
        %v378 = vld [vmem:[#allocation7] sm:$0xff]
        %v379 = vld [vmem:[#allocation7 + $0x8] sm:$0xff]
        %v380 = vld [vmem:[#allocation7 + $0x10] sm:$0xff]
        %v381 = vld [vmem:[#allocation7 + $0x18] sm:$0xff]
        %v382 = vld [vmem:[#allocation7 + $0x20] sm:$0xff]
        %v383 = vld [vmem:[#allocation7 + $0x28] sm:$0xff]
        %v384 = vld [vmem:[#allocation7 + $0x30] sm:$0xff]
        %v385 = vld [vmem:[#allocation7 + $0x38] sm:$0xff]
        %v386 = vld [vmem:[#allocation7 + $0x40] sm:$0xff]
        %v387 = vld [vmem:[#allocation7 + $0x48] sm:$0xff]
        %v388 = vld [vmem:[#allocation7 + $0x50] sm:$0xff]
        %v389 = vld [vmem:[#allocation7 + $0x58] sm:$0xff]
        %v390 = vld [vmem:[%s3] sm:$0x7]
        %v392 = vlaneseq
        %v393 = vshrl.u32 %v392, 7
        %v394 = vsub.s32 0, %v393
        %v395 = vrot.slane %v390, %v394
        %v396 = vlaneseq
        %v397 = vshrl.u32 %v396, 7
        %v398 = vsub.s32 1, %v397
        %v399 = vrot.slane %v390, %v398
        %v400 = vlaneseq
        %v401 = vshrl.u32 %v400, 7
        %v402 = vsub.s32 2, %v401
        %v403 = vrot.slane %v390, %v402
        %vm407 = vcmask 261120
        %v409 = vsel %vm407, %v375, 0
        %v412 = vsel %vm407, %v376, 0
        %414 = vmatprep.subr.mxu0 %v379
        %415 = vmatpush1.msra.mxu0 %v378
        %416 = vmatprep.subr.mxu0 %v382
        %417 = vmatpush1.msra.mxu0 %v381
        %418 = vmatprep.subr.mxu0 %v385
        %419 = vmatpush1.msra.mxu0 %v384
        %420 = vmatprep.subr.mxu0 %v388
        %421 = vmatpush1.msra.mxu0 %v387
        %422 = vmatprep.subr.mxu0 0.0
        %423 = vmatpush1.msra.mxu0 0.0
        %424 = vmatprep.subr.mxu0 0.0
        %425 = vmatpush1.msra.mxu0 0.0
        %426 = vmatprep.subr.mxu0 0.0
        %427 = vmatpush1.msra.mxu0 0.0
        %428 = vmatprep.subr.mxu0 0.0
        %429 = vmatpush1.msra.mxu0 0.0
        %430 = vmatprep.subr.mxu0 0.0
        %431 = vmatpush1.msra.mxu0 0.0
        %432 = vmatprep.subr.mxu0 0.0
        %433 = vmatpush1.msra.mxu0 0.0
        %434 = vmatprep.subr.mxu0 0.0
        %435 = vmatpush1.msra.mxu0 0.0
        %436 = vmatprep.subr.mxu0 0.0
        %437 = vmatpush1.msra.mxu0 0.0
        %438 = vmatprep.subr.mxu0 0.0
        %439 = vmatpush1.msra.mxu0 0.0
        %440 = vmatprep.subr.mxu0 0.0
        %441 = vmatpush1.msra.mxu0 0.0
        %442 = vmatprep.subr.mxu0 0.0
        %443 = vmatpush1.msra.mxu0 0.0
        %444 = vmatprep.subr.mxu0 0.0
        %445 = vmatpush1.msra.mxu0 0.0
        %446 = vmatprep.subr.mxu0 0.0
        %447 = vmatpush1.msra.mxu0 0.0
        %448 = vmatprep.subr.mxu0 0.0
        %449 = vmatpush1.msra.mxu0 0.0
        %450 = vmatprep.subr.mxu0 0.0
        %451 = vmatpush1.msra.mxu0 0.0
        %452 = vmatprep.subr.mxu0 0.0
        %453 = vmatpush1.msra.mxu0 0.0
        %454 = vmatprep.subr.mxu0 0.0
        %455 = vmatpush1.msra.mxu0 0.0
        %456 = vmatprep.subr.mxu0 0.0
        %457 = vmatpush1.msra.mxu0 0.0
        %458 = vmatprep.subr.mxu0 0.0
        %459 = vmatpush1.msra.mxu0 0.0
        %460 = vmatprep.subr.mxu0 0.0
        %461 = vmatpush1.msra.mxu0 0.0
        %462 = vmatprep.subr.mxu0 0.0
        %463 = vmatpush1.msra.mxu0 0.0
        %464 = vmatprep.subr.mxu0 0.0
        %465 = vmatpush1.msra.mxu0 0.0
        %466 = vmatprep.subr.mxu0 0.0
        %467 = vmatpush1.msra.mxu0 0.0
        %468 = vmatprep.subr.mxu0 0.0
        %469 = vmatpush1.msra.mxu0 0.0
        %470 = vmatprep.subr.mxu0 0.0
        %471 = vmatpush1.msra.mxu0 0.0
        %472 = vmatprep.subr.mxu0 0.0
        %473 = vmatpush1.msra.mxu0 0.0
        %474 = vmatprep.subr.mxu0 0.0
        %475 = vmatpush1.msra.mxu0 0.0
        %476 = vmatprep.subr.mxu0 0.0
        %477 = vmatpush1.msra.mxu0 0.0
        %478 = vmatprep.mubr.f32.mxu0 0.0
        %479 = vmatmul.mubr.f32.gmra.mrb[0].mxu0 %v409
        %v480 = vpop.f32.mrb[0].mxu0
        %v481 = vadd.f32 %v395, %v480
        %v482 = vpop.f32.mrb[0].mxu0
        %v483 = vadd.f32 %v399, %v482
        %484 = vmatprep.mubr.f32.mxu0 0.0
        %485 = vmatmul.mubr.f32.gmra.mrb[0].mxu0 %v412
        %v486 = vpop.f32.mrb[0].mxu0
        %v487 = vadd.f32 %v395, %v486
        %v488 = vpop.f32.mrb[0].mxu0
        %v489 = vadd.f32 %v399, %v488
        %490 = vdwg.mxu0
        %491 = vmatprep.subr.mxu0 0.0
        %492 = vmatpush1.msra.mxu0 %v380
        %493 = vmatprep.subr.mxu0 0.0
        %494 = vmatpush1.msra.mxu0 %v383
        %495 = vmatprep.subr.mxu0 0.0
        %496 = vmatpush1.msra.mxu0 %v386
        %497 = vmatprep.subr.mxu0 0.0
        %498 = vmatpush1.msra.mxu0 %v389
        %499 = vmatprep.subr.mxu0 0.0
        %500 = vmatpush1.msra.mxu0 0.0
        %501 = vmatprep.subr.mxu0 0.0
        %502 = vmatpush1.msra.mxu0 0.0
        %503 = vmatprep.subr.mxu0 0.0
        %504 = vmatpush1.msra.mxu0 0.0
        %505 = vmatprep.subr.mxu0 0.0
        %506 = vmatpush1.msra.mxu0 0.0
        %507 = vmatprep.subr.mxu0 0.0
        %508 = vmatpush1.msra.mxu0 0.0
        %509 = vmatprep.subr.mxu0 0.0
        %510 = vmatpush1.msra.mxu0 0.0
        %511 = vmatprep.subr.mxu0 0.0
        %512 = vmatpush1.msra.mxu0 0.0
        %513 = vmatprep.subr.mxu0 0.0
        %514 = vmatpush1.msra.mxu0 0.0
        %515 = vmatprep.subr.mxu0 0.0
        %516 = vmatpush1.msra.mxu0 0.0
        %517 = vmatprep.subr.mxu0 0.0
        %518 = vmatpush1.msra.mxu0 0.0
        %519 = vmatprep.subr.mxu0 0.0
        %520 = vmatpush1.msra.mxu0 0.0
        %521 = vmatprep.subr.mxu0 0.0
        %522 = vmatpush1.msra.mxu0 0.0
        %523 = vmatprep.subr.mxu0 0.0
        %524 = vmatpush1.msra.mxu0 0.0
        %525 = vmatprep.subr.mxu0 0.0
        %526 = vmatpush1.msra.mxu0 0.0
        %527 = vmatprep.subr.mxu0 0.0
        %528 = vmatpush1.msra.mxu0 0.0
        %529 = vmatprep.subr.mxu0 0.0
        %530 = vmatpush1.msra.mxu0 0.0
        %531 = vmatprep.subr.mxu0 0.0
        %532 = vmatpush1.msra.mxu0 0.0
        %533 = vmatprep.subr.mxu0 0.0
        %534 = vmatpush1.msra.mxu0 0.0
        %535 = vmatprep.subr.mxu0 0.0
        %536 = vmatpush1.msra.mxu0 0.0
        %537 = vmatprep.subr.mxu0 0.0
        %538 = vmatpush1.msra.mxu0 0.0
        %539 = vmatprep.subr.mxu0 0.0
        %540 = vmatpush1.msra.mxu0 0.0
        %541 = vmatprep.subr.mxu0 0.0
        %542 = vmatpush1.msra.mxu0 0.0
        %543 = vmatprep.subr.mxu0 0.0
        %544 = vmatpush1.msra.mxu0 0.0
        %545 = vmatprep.subr.mxu0 0.0
        %546 = vmatpush1.msra.mxu0 0.0
        %547 = vmatprep.subr.mxu0 0.0
        %548 = vmatpush1.msra.mxu0 0.0
        %549 = vmatprep.subr.mxu0 0.0
        %550 = vmatpush1.msra.mxu0 0.0
        %551 = vmatprep.subr.mxu0 0.0
        %552 = vmatpush1.msra.mxu0 0.0
        %553 = vmatprep.subr.mxu0 0.0
        %554 = vmatpush1.msra.mxu0 0.0
        %555 = vmatprep.mubr.f32.mxu0 0.0
        %556 = vmatmul.mubr.f32.gmra.mrb[0].mxu0 %v409
        %v557 = vpop.f32.mrb[0].mxu0
        %v558 = vadd.f32 %v403, %v557
        %v559 = vpop.f32.mrb[0].mxu0
        %560 = vmatprep.mubr.f32.mxu0 0.0
        %561 = vmatmul.mubr.f32.gmra.mrb[0].mxu0 %v412
        %v562 = vpop.f32.mrb[0].mxu0
        %v563 = vadd.f32 %v403, %v562
        %v564 = vpop.f32.mrb[0].mxu0
        %565 = vdwg.mxu0
        %v566 = vld [vmem:[#allocation8] sm:$0xff]
        %v567 = vld [vmem:[#allocation8 + $0x8] sm:$0xff]
        %v568 = vld [vmem:[%s5] sm:$0x1]
        %v570 = vlaneseq
        %v571 = vshrl.u32 %v570, 7
        %v572 = vsub.s32 0, %v571
        %v573 = vrot.slane %v568, %v572
        %vm575 = vcmask 130048
        %v577 = vsel %vm575, %v377, 0
        %579 = vmatprep.subr.mxu0 0.0
        %580 = vmatpush1.msra.mxu0 %v566
        %581 = vmatprep.subr.mxu0 0.0
        %582 = vmatpush1.msra.mxu0 %v567
        %583 = vmatprep.subr.mxu0 0.0
        %584 = vmatpush1.msra.mxu0 0.0
        %585 = vmatprep.subr.mxu0 0.0
        %586 = vmatpush1.msra.mxu0 0.0
        %587 = vmatprep.subr.mxu0 0.0
        %588 = vmatpush1.msra.mxu0 0.0
        %589 = vmatprep.subr.mxu0 0.0
        %590 = vmatpush1.msra.mxu0 0.0
        %591 = vmatprep.subr.mxu0 0.0
        %592 = vmatpush1.msra.mxu0 0.0
        %593 = vmatprep.subr.mxu0 0.0
        %594 = vmatpush1.msra.mxu0 0.0
        %595 = vmatprep.subr.mxu0 0.0
        %596 = vmatpush1.msra.mxu0 0.0
        %597 = vmatprep.subr.mxu0 0.0
        %598 = vmatpush1.msra.mxu0 0.0
        %599 = vmatprep.subr.mxu0 0.0
        %600 = vmatpush1.msra.mxu0 0.0
        %601 = vmatprep.subr.mxu0 0.0
        %602 = vmatpush1.msra.mxu0 0.0
        %603 = vmatprep.subr.mxu0 0.0
        %604 = vmatpush1.msra.mxu0 0.0
        %605 = vmatprep.subr.mxu0 0.0
        %606 = vmatpush1.msra.mxu0 0.0
        %607 = vmatprep.subr.mxu0 0.0
        %608 = vmatpush1.msra.mxu0 0.0
        %609 = vmatprep.subr.mxu0 0.0
        %610 = vmatpush1.msra.mxu0 0.0
        %611 = vmatprep.subr.mxu0 0.0
        %612 = vmatpush1.msra.mxu0 0.0
        %613 = vmatprep.subr.mxu0 0.0
        %614 = vmatpush1.msra.mxu0 0.0
        %615 = vmatprep.subr.mxu0 0.0
        %616 = vmatpush1.msra.mxu0 0.0
        %617 = vmatprep.subr.mxu0 0.0
        %618 = vmatpush1.msra.mxu0 0.0
        %619 = vmatprep.subr.mxu0 0.0
        %620 = vmatpush1.msra.mxu0 0.0
        %621 = vmatprep.subr.mxu0 0.0
        %622 = vmatpush1.msra.mxu0 0.0
        %623 = vmatprep.subr.mxu0 0.0
        %624 = vmatpush1.msra.mxu0 0.0
        %625 = vmatprep.subr.mxu0 0.0
        %626 = vmatpush1.msra.mxu0 0.0
        %627 = vmatprep.subr.mxu0 0.0
        %628 = vmatpush1.msra.mxu0 0.0
        %629 = vmatprep.subr.mxu0 0.0
        %630 = vmatpush1.msra.mxu0 0.0
        %631 = vmatprep.subr.mxu0 0.0
        %632 = vmatpush1.msra.mxu0 0.0
        %633 = vmatprep.subr.mxu0 0.0
        %634 = vmatpush1.msra.mxu0 0.0
        %635 = vmatprep.subr.mxu0 0.0
        %636 = vmatpush1.msra.mxu0 0.0
        %637 = vmatprep.subr.mxu0 0.0
        %638 = vmatpush1.msra.mxu0 0.0
        %639 = vmatprep.subr.mxu0 0.0
        %640 = vmatpush1.msra.mxu0 0.0
        %641 = vmatprep.subr.mxu0 0.0
        %642 = vmatpush1.msra.mxu0 0.0
        %643 = vmatprep.mubr.f32.mxu0 0.0
        %644 = vmatmul.mubr.f32.gmra.mrb[0].mxu0 %v577
        %v645 = vpop.f32.mrb[0].mxu0
        %v646 = vadd.f32 %v573, %v645
        %v647 = vpop.f32.mrb[0].mxu0
        %648 = vdwg.mxu0
        %v649 = vmul.f32 %v646, %v646
        %650 = vadd.xlane.f32.xlu0 %v649
        %v651 = vpop.xlane.xlu0 %650
        %v652 = vrot.slane %v651, 4
        %v653 = vadd.f32 %v651, %v652
        %v654 = vrot.slane %v653, 2
        %v655 = vadd.f32 %v653, %v654
        %v656 = vrot.slane %v655, 1
        %v657 = vadd.f32 %v655, %v656
        %v658 = vmul.f32 %v657, 16.0
        %v659 = vrsqrt.pop %v658
        %v660 = vmul.f32 %v658, %v659
        %vm661 = vcmp.eq.f32.partialorder %v658, inf
        %v662 = vsel %vm661, %v658, %v660
        %vm663 = vcmp.eq.f32.partialorder %v658, 0.0
        %v664 = vand.u32 %v658, 2147483648
        %v665 = vsel %vm663, %v664, %v662
        %666 = vxpose.xlu0.b32.start [1/16] %v646, 128
        %667 = vxpose.xlu0.b32.cont [2/16] 0.0, 128
        %668 = vxpose.xlu0.b32.cont [3/16] 0.0, 128
        %669 = vxpose.xlu0.b32.cont [4/16] 0.0, 128
        %670 = vxpose.xlu0.b32.cont [5/16] 0.0, 128
        %671 = vxpose.xlu0.b32.cont [6/16] 0.0, 128
        %672 = vxpose.xlu0.b32.cont [7/16] 0.0, 128
        %673 = vxpose.xlu0.b32.cont [8/16] 0.0, 128
        %674 = vxpose.xlu0.b32.cont [9/16] 0.0, 128
        %675 = vxpose.xlu0.b32.cont [10/16] 0.0, 128
        %676 = vxpose.xlu0.b32.cont [11/16] 0.0, 128
        %677 = vxpose.xlu0.b32.cont [12/16] 0.0, 128
        %678 = vxpose.xlu0.b32.cont [13/16] 0.0, 128
        %679 = vxpose.xlu0.b32.cont [14/16] 0.0, 128
        %680 = vxpose.xlu0.b32.cont [15/16] 0.0, 128
        %681 = vxpose.xlu0.b32.end [16/16] 0.0, 128
        %v682 = vpop.trf.xlu0
        %v683 = vpop.trf.xlu0
        %v684 = vpop.trf.xlu0
        %v685 = vpop.trf.xlu0
        %v686 = vpop.trf.xlu0
        %v687 = vpop.trf.xlu0
        %v688 = vpop.trf.xlu0
        %v689 = vpop.trf.xlu0
        %v690 = vpop.trf.xlu0
        %v691 = vpop.trf.xlu0
        %v692 = vpop.trf.xlu0
        %v693 = vpop.trf.xlu0
        %v694 = vpop.trf.xlu0
        %v695 = vpop.trf.xlu0
        %v696 = vpop.trf.xlu0
        %v697 = vpop.trf.xlu0
        %vm698 = vcmask 64512
        %v700 = vsel %vm698, %v682, 0
        %v703 = vsel %vm698, %v683, 0
        %v706 = vsel %vm698, %v684, 0
        %v709 = vsel %vm698, %v685, 0
        %v712 = vsel %vm698, %v686, 0
        %v715 = vsel %vm698, %v687, 0
        %v718 = vsel %vm698, %v688, 0
        %v721 = vsel %vm698, %v689, 0
        %v724 = vsel %vm698, %v690, 0
        %v727 = vsel %vm698, %v691, 0
        %v730 = vsel %vm698, %v692, 0
        %v733 = vsel %vm698, %v693, 0
        %v736 = vsel %vm698, %v694, 0
        %v739 = vsel %vm698, %v695, 0
        %v742 = vsel %vm698, %v696, 0
        %v745 = vsel %vm698, %v697, 0
        %747 = vmatprep.subr.mxu0 0.0
        %748 = vmatpush1.msra.mxu0 %v646
        %749 = vmatprep.subr.mxu0 0.0
        %750 = vmatpush1.msra.mxu0 0.0
        %751 = vmatprep.subr.mxu0 0.0
        %752 = vmatpush1.msra.mxu0 0.0
        %753 = vmatprep.subr.mxu0 0.0
        %754 = vmatpush1.msra.mxu0 0.0
        %755 = vmatprep.subr.mxu0 0.0
        %756 = vmatpush1.msra.mxu0 0.0
        %757 = vmatprep.subr.mxu0 0.0
        %758 = vmatpush1.msra.mxu0 0.0
        %759 = vmatprep.subr.mxu0 0.0
        %760 = vmatpush1.msra.mxu0 0.0
        %761 = vmatprep.subr.mxu0 0.0
        %762 = vmatpush1.msra.mxu0 0.0
        %763 = vmatprep.subr.mxu0 0.0
        %764 = vmatpush1.msra.mxu0 0.0
        %765 = vmatprep.subr.mxu0 0.0
        %766 = vmatpush1.msra.mxu0 0.0
        %767 = vmatprep.subr.mxu0 0.0
        %768 = vmatpush1.msra.mxu0 0.0
        %769 = vmatprep.subr.mxu0 0.0
        %770 = vmatpush1.msra.mxu0 0.0
        %771 = vmatprep.subr.mxu0 0.0
        %772 = vmatpush1.msra.mxu0 0.0
        %773 = vmatprep.subr.mxu0 0.0
        %774 = vmatpush1.msra.mxu0 0.0
        %775 = vmatprep.subr.mxu0 0.0
        %776 = vmatpush1.msra.mxu0 0.0
        %777 = vmatprep.subr.mxu0 0.0
        %778 = vmatpush1.msra.mxu0 0.0
        %779 = vmatprep.subr.mxu0 0.0
        %780 = vmatpush1.msra.mxu0 0.0
        %781 = vmatprep.subr.mxu0 0.0
        %782 = vmatpush1.msra.mxu0 0.0
        %783 = vmatprep.subr.mxu0 0.0
        %784 = vmatpush1.msra.mxu0 0.0
        %785 = vmatprep.subr.mxu0 0.0
        %786 = vmatpush1.msra.mxu0 0.0
        %787 = vmatprep.subr.mxu0 0.0
        %788 = vmatpush1.msra.mxu0 0.0
        %789 = vmatprep.subr.mxu0 0.0
        %790 = vmatpush1.msra.mxu0 0.0
        %791 = vmatprep.subr.mxu0 0.0
        %792 = vmatpush1.msra.mxu0 0.0
        %793 = vmatprep.subr.mxu0 0.0
        %794 = vmatpush1.msra.mxu0 0.0
        %795 = vmatprep.subr.mxu0 0.0
        %796 = vmatpush1.msra.mxu0 0.0
        %797 = vmatprep.subr.mxu0 0.0
        %798 = vmatpush1.msra.mxu0 0.0
        %799 = vmatprep.subr.mxu0 0.0
        %800 = vmatpush1.msra.mxu0 0.0
        %801 = vmatprep.subr.mxu0 0.0
        %802 = vmatpush1.msra.mxu0 0.0
        %803 = vmatprep.subr.mxu0 0.0
        %804 = vmatpush1.msra.mxu0 0.0
        %805 = vmatprep.subr.mxu0 0.0
        %806 = vmatpush1.msra.mxu0 0.0
        %807 = vmatprep.subr.mxu0 0.0
        %808 = vmatpush1.msra.mxu0 0.0
        %809 = vmatprep.subr.mxu0 0.0
        %810 = vmatpush1.msra.mxu0 0.0
        %811 = vmatprep.mubr.f32.mxu0 0.0
        %812 = vmatmul.mubr.f32.gmra.mrb[0].mxu0 %v700
        %v813 = vpop.f32.mrb[0].mxu0
        %v814 = vadd.f32 0.0, %v813
        %v815 = vpop.f32.mrb[0].mxu0
        %816 = vmatprep.mubr.f32.mxu0 0.0
        %817 = vmatmul.mubr.f32.gmra.mrb[0].mxu0 %v703
        %v818 = vpop.f32.mrb[0].mxu0
        %v819 = vadd.f32 0.0, %v818
        %v820 = vpop.f32.mrb[0].mxu0
        %821 = vmatprep.mubr.f32.mxu0 0.0
        %822 = vmatmul.mubr.f32.gmra.mrb[0].mxu0 %v706
        %v823 = vpop.f32.mrb[0].mxu0
        %v824 = vadd.f32 0.0, %v823
        %v825 = vpop.f32.mrb[0].mxu0
        %826 = vmatprep.mubr.f32.mxu0 0.0
        %827 = vmatmul.mubr.f32.gmra.mrb[0].mxu0 %v709
        %v828 = vpop.f32.mrb[0].mxu0
        %v829 = vadd.f32 0.0, %v828
        %v830 = vpop.f32.mrb[0].mxu0
        %831 = vmatprep.mubr.f32.mxu0 0.0
        %832 = vmatmul.mubr.f32.gmra.mrb[0].mxu0 %v712
        %v833 = vpop.f32.mrb[0].mxu0
        %v834 = vadd.f32 0.0, %v833
        %v835 = vpop.f32.mrb[0].mxu0
        %836 = vmatprep.mubr.f32.mxu0 0.0
        %837 = vmatmul.mubr.f32.gmra.mrb[0].mxu0 %v715
        %v838 = vpop.f32.mrb[0].mxu0
        %v839 = vadd.f32 0.0, %v838
        %v840 = vpop.f32.mrb[0].mxu0
        %841 = vmatprep.mubr.f32.mxu0 0.0
        %842 = vmatmul.mubr.f32.gmra.mrb[0].mxu0 %v718
        %v843 = vpop.f32.mrb[0].mxu0
        %v844 = vadd.f32 0.0, %v843
        %v845 = vpop.f32.mrb[0].mxu0
        %846 = vmatprep.mubr.f32.mxu0 0.0
        %847 = vmatmul.mubr.f32.gmra.mrb[0].mxu0 %v721
        %v848 = vpop.f32.mrb[0].mxu0
        %v849 = vadd.f32 0.0, %v848
        %v850 = vpop.f32.mrb[0].mxu0
        %851 = vmatprep.mubr.f32.mxu0 0.0
        %852 = vmatmul.mubr.f32.gmra.mrb[0].mxu0 %v724
        %v853 = vpop.f32.mrb[0].mxu0
        %v854 = vadd.f32 0.0, %v853
        %v855 = vpop.f32.mrb[0].mxu0
        %856 = vmatprep.mubr.f32.mxu0 0.0
        %857 = vmatmul.mubr.f32.gmra.mrb[0].mxu0 %v727
        %v858 = vpop.f32.mrb[0].mxu0
        %v859 = vadd.f32 0.0, %v858
        %v860 = vpop.f32.mrb[0].mxu0
        %861 = vmatprep.mubr.f32.mxu0 0.0
        %862 = vmatmul.mubr.f32.gmra.mrb[0].mxu0 %v730
        %v863 = vpop.f32.mrb[0].mxu0
        %v864 = vadd.f32 0.0, %v863
        %v865 = vpop.f32.mrb[0].mxu0
        %866 = vmatprep.mubr.f32.mxu0 0.0
        %867 = vmatmul.mubr.f32.gmra.mrb[0].mxu0 %v733
        %v868 = vpop.f32.mrb[0].mxu0
        %v869 = vadd.f32 0.0, %v868
        %v870 = vpop.f32.mrb[0].mxu0
        %871 = vmatprep.mubr.f32.mxu0 0.0
        %872 = vmatmul.mubr.f32.gmra.mrb[0].mxu0 %v736
        %v873 = vpop.f32.mrb[0].mxu0
        %v874 = vadd.f32 0.0, %v873
        %v875 = vpop.f32.mrb[0].mxu0
        %876 = vmatprep.mubr.f32.mxu0 0.0
        %877 = vmatmul.mubr.f32.gmra.mrb[0].mxu0 %v739
        %v878 = vpop.f32.mrb[0].mxu0
        %v879 = vadd.f32 0.0, %v878
        %v880 = vpop.f32.mrb[0].mxu0
        %881 = vmatprep.mubr.f32.mxu0 0.0
        %882 = vmatmul.mubr.f32.gmra.mrb[0].mxu0 %v742
        %v883 = vpop.f32.mrb[0].mxu0
        %v884 = vadd.f32 0.0, %v883
        %v885 = vpop.f32.mrb[0].mxu0
        %886 = vmatprep.mubr.f32.mxu0 0.0
        %887 = vmatmul.mubr.f32.gmra.mrb[0].mxu0 %v745
        %v888 = vpop.f32.mrb[0].mxu0
        %v889 = vadd.f32 0.0, %v888
        %v890 = vpop.f32.mrb[0].mxu0
        %891 = vdwg.mxu0
        %v892 = vadd.f32 %v665, 1e-08
        %v893 = vmul.f32 %v892, 5.656854
        %v894 = vrcp.pop %v893
        %v895 = vmul.f32 16.0, %v894
        %v896 = vmul.f32 %v814, %v895
        %v897 = vmul.f32 %v819, %v895
        %v898 = vmul.f32 %v824, %v895
        %v899 = vmul.f32 %v829, %v895
        %v900 = vmul.f32 %v834, %v895
        %v901 = vmul.f32 %v839, %v895
        %v902 = vmul.f32 %v844, %v895
        %v903 = vmul.f32 %v849, %v895
        %v904 = vmul.f32 %v854, %v895
        %v905 = vmul.f32 %v859, %v895
        %v906 = vmul.f32 %v864, %v895
        %v907 = vmul.f32 %v869, %v895
        %v908 = vmul.f32 %v874, %v895
        %v909 = vmul.f32 %v879, %v895
        %v910 = vmul.f32 %v884, %v895
        %v911 = vmul.f32 %v889, %v895
        %v912 = vpack.c.bf16 %v487, %v481
        %v913 = vpack.c.bf16 %v897, %v896
        %v914 = vpack.c.bf16 %v899, %v898
        %v915 = vpack.c.bf16 %v901, %v900
        %v916 = vpack.c.bf16 %v903, %v902
        %v917 = vpack.c.bf16 %v905, %v904
        %v918 = vpack.c.bf16 %v907, %v906
        %v919 = vpack.c.bf16 %v909, %v908
        %v920 = vpack.c.bf16 %v911, %v910
        %921 = vmatprep.subr.bf16.mxu0 0
        %922 = vmatpush1.bf16.msra.mxu0 %v913
        %923 = vmatprep.subr.bf16.mxu0 0
        %924 = vmatpush1.bf16.msra.mxu0 %v914
        %925 = vmatprep.subr.bf16.mxu0 0
        %926 = vmatpush1.bf16.msra.mxu0 %v915
        %927 = vmatprep.subr.bf16.mxu0 0
        %928 = vmatpush1.bf16.msra.mxu0 %v916
        %929 = vmatprep.subr.bf16.mxu0 0
        %930 = vmatpush1.bf16.msra.mxu0 %v917
        %931 = vmatprep.subr.bf16.mxu0 0
        %932 = vmatpush1.bf16.msra.mxu0 %v918
        %933 = vmatprep.subr.bf16.mxu0 0
        %934 = vmatpush1.bf16.msra.mxu0 %v919
        %935 = vmatprep.subr.bf16.mxu0 0
        %936 = vmatpush1.bf16.msra.mxu0 %v920
        %937 = vmatprep.subr.bf16.mxu0 0
        %938 = vmatpush1.bf16.msra.mxu0 0
        %939 = vmatprep.subr.bf16.mxu0 0
        %940 = vmatpush1.bf16.msra.mxu0 0
        %941 = vmatprep.subr.bf16.mxu0 0
        %942 = vmatpush1.bf16.msra.mxu0 0
        %943 = vmatprep.subr.bf16.mxu0 0
        %944 = vmatpush1.bf16.msra.mxu0 0
        %945 = vmatprep.subr.bf16.mxu0 0
        %946 = vmatpush1.bf16.msra.mxu0 0
        %947 = vmatprep.subr.bf16.mxu0 0
        %948 = vmatpush1.bf16.msra.mxu0 0
        %949 = vmatprep.subr.bf16.mxu0 0
        %950 = vmatpush1.bf16.msra.mxu0 0
        %951 = vmatprep.subr.bf16.mxu0 0
        %952 = vmatpush1.bf16.msra.mxu0 0
        %953 = vmatprep.mubr.bf16.mxu0 0
        %954 = vmatmul.mubr.bf16.gmra.mrb[0].mxu0 %v912
        %v955 = vpop.f32.mrb[0].mxu0
        %v956 = vadd.f32 0.0, %v955
        %v957 = vpop.f32.mrb[0].mxu0
        %v958 = vpop.f32.mrb[0].mxu0
        %v959 = vadd.f32 0.0, %v958
        %v960 = vpop.f32.mrb[0].mxu0
        %961 = vdwg.mxu0
        %v962 = vpack.c.bf16 %v959, %v956
        %v963 = vpack.c.bf16 %v489, %v483
        %v964 = vpack.c.bf16 0.0, 0.0
        %965 = vmatprep.subr.bf16.mxu0 0
        %966 = vmatpush1.bf16.xpose.msra.mxu0 %v963
        %967 = vmatprep.subr.bf16.mxu0 0
        %968 = vmatpush1.bf16.xpose.msra.mxu0 %v964
        %969 = vmatprep.subr.bf16.mxu0 0
        %970 = vmatpush1.bf16.xpose.msra.mxu0 %v964
        %971 = vmatprep.subr.bf16.mxu0 0
        %972 = vmatpush1.bf16.xpose.msra.mxu0 %v964
        %973 = vmatprep.subr.bf16.mxu0 0
        %974 = vmatpush1.bf16.xpose.msra.mxu0 %v964
        %975 = vmatprep.subr.bf16.mxu0 0
        %976 = vmatpush1.bf16.xpose.msra.mxu0 %v964
        %977 = vmatprep.subr.bf16.mxu0 0
        %978 = vmatpush1.bf16.xpose.msra.mxu0 %v964
        %979 = vmatprep.subr.bf16.mxu0 0
        %980 = vmatpush1.bf16.xpose.msra.mxu0 %v964
        %981 = vmatprep.subr.bf16.mxu0 0
        %982 = vmatpush1.bf16.xpose.msra.mxu0 0
        %983 = vmatprep.subr.bf16.mxu0 0
        %984 = vmatpush1.bf16.xpose.msra.mxu0 0
        %985 = vmatprep.subr.bf16.mxu0 0
        %986 = vmatpush1.bf16.xpose.msra.mxu0 0
        %987 = vmatprep.subr.bf16.mxu0 0
        %988 = vmatpush1.bf16.xpose.msra.mxu0 0
        %989 = vmatprep.subr.bf16.mxu0 0
        %990 = vmatpush1.bf16.xpose.msra.mxu0 0
        %991 = vmatprep.subr.bf16.mxu0 0
        %992 = vmatpush1.bf16.xpose.msra.mxu0 0
        %993 = vmatprep.subr.bf16.mxu0 0
        %994 = vmatpush1.bf16.xpose.msra.mxu0 0
        %995 = vmatprep.subr.bf16.mxu0 0
        %996 = vmatpush1.bf16.xpose.msra.mxu0 0
        %997 = vmatprep.mubr.bf16.mxu0 0
        %998 = vmatmul.mubr.bf16.gmra.mrb[0].mxu0 %v962
        %v999 = vpop.f32.mrb[0].mxu0
        %v1000 = vadd.f32 0.0, %v999
        %v1001 = vpop.f32.mrb[0].mxu0
        %v1002 = vpop.f32.mrb[0].mxu0
        %v1003 = vadd.f32 0.0, %v1002
        %v1004 = vpop.f32.mrb[0].mxu0
        %1005 = vdwg.mxu0
        %v1006 = vlaneseq
        %v1007 = vand.u32 %v1006, 127
        %vm1008 = vcmp.lt.s32.totalorder %v1007, 16
        %v1009 = vsel %vm1008, 1, 0
        %vm1010 = vcmp.eq.s32.totalorder %v1009, 1
        %v1011 = vsel %vm1010, %v1000, -1e+30
        %v1012 = vsel %vm1010, %v1003, -1e+30
        %1013 = vmax.xlane.f32.xlu0 %v1011
        %v1014 = vpop.xlane.xlu0 %1013
        %1015 = vmax.xlane.f32.xlu0 %v1012
        %v1016 = vpop.xlane.xlu0 %1015
        %v1017 = vsub.f32 %v1011, %v1014
        %v1018 = vsub.f32 %v1012, %v1016
        %v1019 = vmul.f32 %v1017, 1.442695
        %v1020 = vpow.pop %v1019
        %v1021 = vmul.f32 %v1018, 1.442695
        %v1022 = vpow.pop %v1021
        %1023 = vadd.xlane.f32.xlu0 %v1020
        %v1024 = vpop.xlane.xlu0 %1023
        %1025 = vadd.xlane.f32.xlu0 %v1022
        %v1026 = vpop.xlane.xlu0 %1025
        %v1027 = vrcp.pop %v1024
        %v1028 = vrcp.pop %v1026
        %v1029 = vmul.f32 %v1020, %v1027
        %v1030 = vmul.f32 %v1022, %v1028
        %v1031 = vpack.c.bf16 %v1030, %v1029
        %v1032 = vpack.c.bf16 %v563, %v558
        %1033 = vmatprep.subr.bf16.mxu0 0
        %1034 = vmatpush1.bf16.msra.mxu0 %v1032
        %1035 = vmatprep.subr.bf16.mxu0 0
        %1036 = vmatpush1.bf16.msra.mxu0 %v964
        %1037 = vmatprep.subr.bf16.mxu0 0
        %1038 = vmatpush1.bf16.msra.mxu0 %v964
        %1039 = vmatprep.subr.bf16.mxu0 0
        %1040 = vmatpush1.bf16.msra.mxu0 %v964
        %1041 = vmatprep.subr.bf16.mxu0 0
        %1042 = vmatpush1.bf16.msra.mxu0 %v964
        %1043 = vmatprep.subr.bf16.mxu0 0
        %1044 = vmatpush1.bf16.msra.mxu0 %v964
        %1045 = vmatprep.subr.bf16.mxu0 0
        %1046 = vmatpush1.bf16.msra.mxu0 %v964
        %1047 = vmatprep.subr.bf16.mxu0 0
        %1048 = vmatpush1.bf16.msra.mxu0 %v964
        %1049 = vmatprep.subr.bf16.mxu0 0
        %1050 = vmatpush1.bf16.msra.mxu0 0
        %1051 = vmatprep.subr.bf16.mxu0 0
        %1052 = vmatpush1.bf16.msra.mxu0 0
        %1053 = vmatprep.subr.bf16.mxu0 0
        %1054 = vmatpush1.bf16.msra.mxu0 0
        %1055 = vmatprep.subr.bf16.mxu0 0
        %1056 = vmatpush1.bf16.msra.mxu0 0
        %1057 = vmatprep.subr.bf16.mxu0 0
        %1058 = vmatpush1.bf16.msra.mxu0 0
        %1059 = vmatprep.subr.bf16.mxu0 0
        %1060 = vmatpush1.bf16.msra.mxu0 0
        %1061 = vmatprep.subr.bf16.mxu0 0
        %1062 = vmatpush1.bf16.msra.mxu0 0
        %1063 = vmatprep.subr.bf16.mxu0 0
        %1064 = vmatpush1.bf16.msra.mxu0 0
        %1065 = vmatprep.mubr.bf16.mxu0 0
        %1066 = vmatmul.mubr.bf16.gmra.mrb[0].mxu0 %v1031
        %v1067 = vpop.f32.mrb[0].mxu0
        %v1068 = vadd.f32 0.0, %v1067
        %v1069 = vpop.f32.mrb[0].mxu0
        %v1070 = vpop.f32.mrb[0].mxu0
        %v1071 = vadd.f32 0.0, %v1070
        %v1072 = vpop.f32.mrb[0].mxu0
        %1073 = vdwg.mxu0
        %1074 = vst [vmem:[%s373] sm:$0xff] %v1029
        %1075 = vst [vmem:[%s373 + $0x8] sm:$0xff] %v1030
        %1076 = vst [vmem:[%s366] sm:$0xff] %v1068
        %1077 = vst [vmem:[%s366 + $0x8] sm:$0xff] %v1071
        %s1078 = sand.u32 %s176, 1
        %s1079 = scalar_lea.sflag [#allocation4], %s1078
        %s1080 = sand.u32 %s176, 1
        %s1081 = smul.addr %s1080, 16
        %s1082 = scalar_lea.vmem [#allocation10], %s1081
        %s1083 = sand.u32 %s202, 1
        %s1084 = scalar_lea.sflag [#allocation12], %s1083
        %s1085 = sand.u32 %s202, 1
        %s1086 = smul.addr %s1085, 16
        %s1087 = scalar_lea.vmem [#allocation11], %s1086
        // Predicated region
        $region61: #{tpu_custom_call.1} parent=43 // pred_check
          %p1088 = pneg %p186
        $region62: #{tpu_custom_call.1} parent=43 // pred_check_branch
          %1090 = sbr.rel (%p1088) target = $region64
        $region63: #{tpu_custom_call.1} parent=43 // pred_region
          %s1092 = ssub.s32 256, 256
          %1093 = vsyncadd %s1079, %s1092
          %s1094 = smul.addr %s32, 2
          %s1095 = smul.addr %s1094, 128
          %s1096 = scalar_lea.hbm %s6, %s1095
          %s1097 = sshll.u32 %s1082, 4
          %s1098 = int_to_ptr.vmem [resolvable:$true] %s1097
          %1103 = dma.vmem_to_hbm [thread:$0]  %s1098, 256, %s1096, %s1079, 128, 128, 8
        $region64: #{tpu_custom_call.1} parent=43 // pred_fallthru
          _
        // Predicated region
        $region65: #{tpu_custom_call.1} parent=43 // pred_check
          %p1104 = pneg %p212
        $region66: #{tpu_custom_call.1} parent=43 // pred_check_branch
          %1106 = sbr.rel (%p1104) target = $region68
        $region67: #{tpu_custom_call.1} parent=43 // pred_region
          %s1108 = ssub.s32 256, 256
          %1109 = vsyncadd %s1084, %s1108
          %s1110 = smul.addr %s32, 2
          %s1111 = smul.addr %s1110, 128
          %s1112 = scalar_lea.hbm %s7, %s1111
          %s1113 = sshll.u32 %s1087, 4
          %s1114 = int_to_ptr.vmem [resolvable:$true] %s1113
          %1119 = dma.vmem_to_hbm [thread:$0]  %s1114, 256, %s1112, %s1084, 128, 128, 8
        $region68: #{tpu_custom_call.1} parent=43 // pred_fallthru
          _
      $region44: #{tpu_custom_call.1} parent=5 // pred_fallthru
        _
      %p1120 = scmp.le.s32.totalorder 2, %s27
      // Predicated region
      $region69: #{tpu_custom_call.1} parent=5 // pred_check
        %p1121 = pneg %p1120
      $region70: #{tpu_custom_call.1} parent=5 // pred_check_branch
        %1123 = sbr.rel (%p1121) target = $region72
      $region71: #{tpu_custom_call.1} parent=5 // pred_region
        %s1124 = ssub.s32 %s27, 2
        // Predicated region
        $region73: #{tpu_custom_call.1} parent=71 // pred_check
          %p1125 = pneg %p192
        $region74: #{tpu_custom_call.1} parent=71 // pred_check_branch
          %1127 = sbr.rel (%p1125) target = $region76
        $region75: #{tpu_custom_call.1} parent=71 // pred_region
          %s1128 = sand.u32 %s177, 1
          %s1129 = scalar_lea.sflag [#allocation4], %s1128
          %s1130 = sand.u32 %s177, 1
          %s1131 = smul.addr %s1130, 16
          %s1132 = scalar_lea.vmem [#allocation10], %s1131
          %1133 = dma.done %s1129, 256
        $region76: #{tpu_custom_call.1} parent=71 // pred_fallthru
          _
        // Predicated region
        $region77: #{tpu_custom_call.1} parent=71 // pred_check
          %p1134 = pneg %p218
        $region78: #{tpu_custom_call.1} parent=71 // pred_check_branch
          %1136 = sbr.rel (%p1134) target = $region80
        $region79: #{tpu_custom_call.1} parent=71 // pred_region
          %s1137 = sand.u32 %s203, 1
          %s1138 = scalar_lea.sflag [#allocation12], %s1137
          %s1139 = sand.u32 %s203, 1
          %s1140 = smul.addr %s1139, 16
          %s1141 = scalar_lea.vmem [#allocation11], %s1140
          %1142 = dma.done %s1138, 256
        $region80: #{tpu_custom_call.1} parent=71 // pred_fallthru
          _
      $region72: #{tpu_custom_call.1} parent=5 // pred_fallthru
        _
    $region6: #{tpu_custom_call.1} parent=1 // loop_footer
      %s31 = sadd.s32 1, %s27
    $region7: #{tpu_custom_call.1} parent=1 // loop_footer_branch
      %26 = sbr.rel target = $region3
    $region8: #{tpu_custom_call.1} parent=1 // loop_exit
      _
    %1143 = vsyncpa [#allocation3], 1
    %s1144 = scalar_lea.sflag [#allocation3], 1
    %1145 = vsyncpa %s1144, 1
    %1146 = vsyncpa [#allocation6], 1
    %s1147 = scalar_lea.sflag [#allocation6], 1
    %1148 = vsyncpa %s1147, 1
    %1149 = vsyncpa [#allocation9], 1
    %1150 = vsyncpa [#allocation4], 1
    %s1151 = scalar_lea.sflag [#allocation4], 1
    %1152 = vsyncpa %s1151, 1
    %1153 = vsyncpa [#allocation12], 1
    %s1154 = scalar_lea.sflag [#allocation12], 1
    %1155 = vsyncpa %s1154, 1

</llo_original>
